<compile_context>
chip_gen: v6e
topology: v6e:2x2x1
jax: 0.10.0
libtpu: 0.0.40
codegen_flags: <defaults>
</compile_context>

<pallas_src>
import math

import jax
import jax.numpy as jnp
from jax.experimental import pallas as pl
from jax.experimental.pallas import tpu as pltpu


def _sinusoidal_kernel(x_ref, w_ref, o_ref):
    # x_ref: (1, tb)   f32  -- batch tile on the lane axis
    # w_ref: (Hp, 1)   f32  -- (zero-padded) frequencies on sublanes
    # o_ref: (2Hp, tb) f32  -- rows [0:Hp] = sin, rows [Hp:2Hp] = cos
    Hp = w_ref.shape[0]
    x = x_ref[...]                                # (1, tb)
    w = w_ref[...] * (2.0 * math.pi)              # (Hp, 1): Hp muls per tile
    freqs = w * x                                 # (Hp, tb) broadcast outer product
    o_ref[:Hp, :] = jnp.sin(freqs)                # sublane-aligned, unmasked stores
    o_ref[Hp:, :] = jnp.cos(freqs)


def _reference(x, weights):
    x2 = x.reshape(-1, 1).astype(jnp.float32)
    freqs = x2 * weights.reshape(1, -1).astype(jnp.float32) * 2.0 * math.pi
    return jnp.concatenate([x2, jnp.sin(freqs), jnp.cos(freqs)], axis=-1)


def random_or_learned_sinusoidal_embedding(
    x, weights, *, tile_b_cap=32768, min_pallas_batch=2048
):
    """x: (B,) float ; weights: (H,) float ; returns (B, 1 + 2*H) float32."""
    B = x.shape[0]
    H = weights.shape[0]
    x32 = x.astype(jnp.float32)
    w32 = weights.astype(jnp.float32)

    # Small-B fallback: launch/dispatch overhead dominates; let XLA fuse it.
    if B < min_pallas_batch:
        return _reference(x32, w32)

    # ---- static tiling decisions (all Python ints) ------------------------
    Hp = max(8, pl.cdiv(H, 8) * 8)                    # sublane-align the row slices
    b128 = max(pl.cdiv(B, 128) * 128, 128)            # lane-align the batch

    # VMEM-aware lane-tile cap: double-buffered (2Hp, tb) output + (1, tb) input,
    # f32, kept under ~24 MiB (safe vs v7x 32 MiB scoped default).
    vmem_budget = 24 << 20
    bytes_per_lane = 2 * (2 * Hp + 1) * 4
    cap = min(tile_b_cap, max(128, ((vmem_budget // bytes_per_lane) // 128) * 128))

    # Balanced split (minimal padding); keep >= 2 grid steps when there is more
    # than one lane-tile of work so both v7x TensorCores get a share.
    grid_b = pl.cdiv(b128, cap)
    if grid_b < 2 and b128 >= 256:
        grid_b = 2
    tb = pl.cdiv(pl.cdiv(b128, grid_b), 128) * 128
    b_pad = grid_b * tb

    # ---- host-side layout prep --------------------------------------------
    x_row = jnp.pad(x32.reshape(1, B), ((0, 0), (0, b_pad - B)))     # (1, b_pad)
    w_col = jnp.pad(w32, (0, Hp - H)).reshape(Hp, 1)                 # (Hp, 1)

    out_t = pl.pallas_call(
        _sinusoidal_kernel,
        out_shape=jax.ShapeDtypeStruct((2 * Hp, b_pad), jnp.float32),
        grid=(grid_b,),
        in_specs=[
            # batch tile on lanes; leading dim equals the full (size-1) dim.
            pl.BlockSpec((1, tb), lambda i: (0, i)),
            # tiny weights: one full block, identical for every grid step.
            pl.BlockSpec((Hp, 1), lambda i: (0, 0)),
        ],
        out_specs=pl.BlockSpec((2 * Hp, tb), lambda i: (0, i)),
        compiler_params=pltpu.CompilerParams(
            dimension_semantics=("parallel",),   # shard batch over TCs (v7x)
        ),
    )(x_row, w_col)

    # Wrapper-side layout plumbing (XLA-fused): crop H/B padding, transpose to
    # (B, 2H) and prepend the x passthrough column -> (B, 1 + 2H).
    sin = out_t[:H, :B].T
    cos = out_t[Hp:Hp + H, :B].T
    return jnp.concatenate([x32.reshape(B, 1), sin, cos], axis=-1)


if __name__ == "__main__":
    in_dim = 16                      # must be even
    half_dim = in_dim // 2

    key = jax.random.PRNGKey(0)
    kx, kw, kx2 = jax.random.split(key, 3)
    # Deterministic stand-in for nn.Parameter(torch.randn(half_dim))
    weights = jax.random.normal(kw, (half_dim,), dtype=jnp.float32)

    # Case 1: tiny batch (force the Pallas path so the kernel itself is tested).
    batch = 8
    x = jax.random.normal(kx, (batch,), dtype=jnp.float32) * 3.0
    out = random_or_learned_sinusoidal_embedding(x, weights, min_pallas_batch=0)
    out = jax.block_until_ready(out)
    ref = _reference(x, weights)
    assert out.shape == (batch, 1 + 2 * half_dim), out.shape
    assert jnp.allclose(out, ref, atol=1e-5, rtol=1e-5), "mismatch (small batch)"

    # Case 2: non-multiple-of-128 batch -> exercises padding + 2-step grid split.
    batch2 = 300
    x2 = jax.random.normal(kx2, (batch2,), dtype=jnp.float32) * 3.0
    out2 = random_or_learned_sinusoidal_embedding(x2, weights, min_pallas_batch=0)
    out2 = jax.block_until_ready(out2)
    ref2 = _reference(x2, weights)
    assert out2.shape == (batch2, 1 + 2 * half_dim), out2.shape
    assert jnp.allclose(out2, ref2, atol=1e-5, rtol=1e-5), "mismatch (padded batch)"

    print("KERNEL_OK")
</pallas_src>

<mosaic_0001>
module attributes {stable_mosaic.version = 11 : i64} {
  func.func @_sinusoidal_kernel(%arg0: i32, %arg1: memref<1x128xf32, #tpu.memory_space<vmem>>, %arg2: memref<8x1xf32, #tpu.memory_space<vmem>>, %arg3: memref<16x128xf32, #tpu.memory_space<vmem>>) attributes {dimension_semantics = [#tpu.dimension_semantics<parallel>], iteration_bounds = array<i64: 1>, scalar_prefetch = 0 : i64, scratch_operands = 0 : i64, tpu.core_type = #tpu.core_type<tc>, window_params = [{transform_indices = @transform_0, window_bounds = array<i64: 1, 128>}, {pipeline_mode = #tpu.pipeline_mode<synchronous>, transform_indices = @transform_1, window_bounds = array<i64: 8, 1>}, {transform_indices = @transform_2, window_bounds = array<i64: 16, 128>}]} {
    %c0 = arith.constant 0 : index
    %c0_0 = arith.constant 0 : index
    %0 = vector.load %arg1[%c0, %c0_0] : memref<1x128xf32, #tpu.memory_space<vmem>>, vector<1x128xf32>
    %c0_1 = arith.constant 0 : index
    %c0_2 = arith.constant 0 : index
    %1 = vector.load %arg2[%c0_1, %c0_2] : memref<8x1xf32, #tpu.memory_space<vmem>>, vector<8x1xf32>
    %cst = arith.constant 6.28318548 : f32
    %2 = vector.broadcast %cst : f32 to vector<8x1xf32>
    %3 = arith.mulf %1, %2 : vector<8x1xf32>
    %4 = vector.broadcast %3 : vector<8x1xf32> to vector<8x128xf32>
    %5 = vector.broadcast %0 : vector<1x128xf32> to vector<8x128xf32>
    %6 = arith.mulf %4, %5 : vector<8x128xf32>
    %7 = math.sin %6 : vector<8x128xf32>
    %c0_3 = arith.constant 0 : index
    %c0_4 = arith.constant 0 : index
    %8 = vector.load %arg3[%c0_3, %c0_4] : memref<16x128xf32, #tpu.memory_space<vmem>>, vector<8x128xf32>
    tpu.vector_store %arg3[%c0_3, %c0_4], %7 {strides = array<i32>} : memref<16x128xf32, #tpu.memory_space<vmem>>, vector<8x128xf32>,
    %9 = math.cos %6 : vector<8x128xf32>
    %c8 = arith.constant 8 : index
    %c0_5 = arith.constant 0 : index
    %10 = vector.load %arg3[%c8, %c0_5] : memref<16x128xf32, #tpu.memory_space<vmem>>, vector<8x128xf32>
    tpu.vector_store %arg3[%c8, %c0_5], %9 {strides = array<i32>} : memref<16x128xf32, #tpu.memory_space<vmem>>, vector<8x128xf32>,
    return
  }
  func.func @transform_0(%arg0: i32) -> (i32, i32) {
    %c0_i32 = arith.constant 0 : i32
    %c0_i32_0 = arith.constant 0 : i32
    return %c0_i32, %arg0 : i32, i32
  }
  func.func @transform_1(%arg0: i32) -> (i32, i32) {
    %c0_i32 = arith.constant 0 : i32
    %c0_i32_0 = arith.constant 0 : i32
    %c0_i32_1 = arith.constant 0 : i32
    return %c0_i32, %c0_i32_0 : i32, i32
  }
  func.func @transform_2(%arg0: i32) -> (i32, i32) {
    %c0_i32 = arith.constant 0 : i32
    %c0_i32_0 = arith.constant 0 : i32
    return %c0_i32, %arg0 : i32, i32
  }
}

</mosaic_0001>

<llo_original>
// kernel: tpu_custom_call.1
$region0: #{tpu_custom_call.1}
  #allocation0 [shape = 'u32[]', space=smem, size = 0x4, offset = 0x4, fixed_abs, tag = 'smem constant byte address 0x4 - core index']
  #allocation1 [shape = 'u32[144,128]{1,0:T(1,128)}', space=vmem, size = 0x12000, scoped, tag = 'internal scratch']
  %s0 = inlined_call_operand.vmem [shape: f32[1,128], index: 0, kind: input, shape index: {}]
  %s1 = inlined_call_operand.vmem [shape: f32[8,1], index: 1, kind: input, shape index: {}]
  %s2 = inlined_call_operand.hbm [shape: f32[16,128], index: 2, kind: output, shape index: {}]
  %s3 = sld [smem:[#allocation0]]
  $region18: #{tpu_custom_call.1} parent=0
    _
  %s5 = ssub.s32 1, %s3
  %s6 = scalar_select 0, %s5, %s3
  $region1: #{tpu_custom_call.1} parent=0
    #allocation2 [shape = 'u8[8192]{0}', space=vmem, size = 0x2000, scoped, tag = 'output window, operand 0, single buffered']
    #allocation3 [shape = 's32[1]{0}', space=sflag, size = 0x4, scoped, tag = 'scoped memory for tpu_custom_call.1']
    %7 = vsyncpa [#allocation3], 0
    // Predicated region
    $region2: #{tpu_custom_call.1} parent=1 // pred_check
      _
    $region3: #{tpu_custom_call.1} parent=1 // pred_check_branch
      %9 = sbr.rel (0) target = $region5
    $region4: #{tpu_custom_call.1} parent=1 // pred_region
      _
    $region5: #{tpu_custom_call.1} parent=1 // pred_fallthru
      _
    // Predicated region
    $region6: #{tpu_custom_call.1} parent=1 // pred_check
      _
    $region7: #{tpu_custom_call.1} parent=1 // pred_check_branch
      %11 = sbr.rel (0) target = $region9
    $region8: #{tpu_custom_call.1} parent=1 // pred_region
      _
    $region9: #{tpu_custom_call.1} parent=1 // pred_fallthru
      _
    %v12 = vld [vmem:[%s0] sm:$0x1]
    %v13 = vld [vmem:[%s1] sm:$0xff]
    %v14 = vmul.f32 %v13, 6.2831855
    %16 = vset.pattern.permute.xlu0 0
    %17 = vperm.xlu0 %16, %v14
    %v18 = vpop.permute.xlu0 %17
    %v21 = vlaneseq
    %v22 = vshrl.u32 %v21, 7
    %v23 = vsub.s32 0, %v22
    %v24 = vrot.slane %v12, %v23
    %v26 = vmul.f32 %v18, %v24
    %v27 = vand.u32 2147483647, %v26
    %vm28 = vcmp.le.f32.partialorder %v27, 0.7853982
    %vm29 = vcmp.lt.s32.totalorder %v26, 0
    %v30 = vand.u32 %v26, 2139095040
    %v31 = vshrl.u32 %v30, 23
    %v32 = vsub.s32 %v31, 127
    %v33 = vand.u32 2147483647, %v26
    %v34 = vand.u32 %v33, 8388607
    %v35 = vor.u32 %v34, 8388608
    %v36 = vsub.s32 0, %v35
    %v37 = vadd.s32 %v32, 1
    %vm38 = vcmp.gt.s32.totalorder %v37, 0
    %v39 = vsel %vm38, %v37, 0
    %v40 = vshrl.u32 %v39, 5
    %v41 = vand.u32 %v39, 31
    %v42 = vsub.s32 32, %v41
    %v43 = vshrl.u32 683565275, %v42
    %v44 = vshll.u32 683565275, %v41
    %v45 = vshrl.u32 2475754826, %v42
    %v46 = vor.u32 %v44, %v45
    %v47 = vshll.u32 2475754826, %v41
    %v48 = vshrl.u32 2131351028, %v42
    %v49 = vor.u32 %v47, %v48
    %v50 = vshll.u32 2131351028, %v41
    %v51 = vshrl.u32 2102212464, %v42
    %v52 = vor.u32 %v50, %v51
    %v53 = vshll.u32 2102212464, %v41
    %v54 = vshrl.u32 920167782, %v42
    %v55 = vor.u32 %v53, %v54
    %v56 = vshll.u32 920167782, %v41
    %v57 = vshrl.u32 1326507024, %v42
    %v58 = vor.u32 %v56, %v57
    %vm59 = vcmp.lt.s32.totalorder %v40, 1
    %vm60 = vcmp.lt.s32.totalorder %v40, 2
    %vm61 = vcmp.lt.s32.totalorder %v40, 3
    %vm62 = vcmp.lt.s32.totalorder %v40, 4
    %v63 = vsel %vm59, %v43, %v46
    %v64 = vsel %vm62, %v52, 2102212464
    %v65 = vsel %vm61, %v49, %v64
    %v66 = vsel %vm60, %v63, %v65
    %v67 = vsel %vm59, %v46, %v49
    %v68 = vsel %vm62, %v55, 920167782
    %v69 = vsel %vm61, %v52, %v68
    %v70 = vsel %vm60, %v67, %v69
    %v71 = vsel %vm59, %v49, %v52
    %v72 = vsel %vm62, %v58, 1326507024
    %v73 = vsel %vm61, %v55, %v72
    %v74 = vsel %vm60, %v71, %v73
    %v75 = vshll.u32 %v35, 8
    %v76 = vmul.u32.u64.compose %v75, %v74
    %v77 = vextract.low.u32 %v76
    %v78 = vextract.high.u32 %v76
    %v79 = vmul.u32.u64.compose %v75, %v70
    %v80 = vextract.low.u32 %v79
    %v81 = vextract.high.u32 %v79
    %v82 = vmul.u32 %v75, %v66
    %v83 = vadd.s32 %v78, %v80
    %vm84 = vc.u32 %v78, %v80
    %v85 = vadd.s32 %v81, 1
    %v86 = vsel %vm84, %v85, %v81
    %v87 = vadd.s32 %v82, %v86
    %v88 = vadd.s32 %v87, 536870912
    %v89 = vshrl.u32 %v88, 30
    %v90 = vshll.u32 %v89, 30
    %v91 = vsub.s32 %v87, %v90
    %vm92 = vcmp.lt.s32.totalorder %v91, 0
    %v93 = vsub.s32 0, %v91
    %v94 = vsel %vm92, %v93, %v91
    %v95 = vclz %v94
    %v96 = vsub.s32 %v95, 2
    %vm97 = vcmp.gt.s32.totalorder 0, %v96
    %v98 = vsel %vm97, 0, %v96
    %v99 = vsub.s32 32, %v98
    %v100 = vshll.u32 %v91, %v98
    %v101 = vshrl.u32 %v83, %v99
    %v102 = vor.u32 %v100, %v101
    %v103 = vsub.s32 4294967266, %v98
    %v104 = vadd.s32 %v103, 127
    %v105 = vshll.u32 %v104, 23
    %v106 = vor.u32 4788187, %v105
    %v107 = vand.u32 2147483647, %v106
    %v109 = vcvt.s32.f32 %v102
    %v110 = vmul.f32 %v109, %v107
    %v111 = vxor.u32 %v110, 2147483648
    %v112 = vsel %vm29, %v111, %v110
    %v113 = vsub.s32 4, %v89
    %v114 = vsel %vm29, %v113, %v89
    %v115 = vsel %vm28, %v26, %v112
    %v116 = vsel %vm28, 0, %v114
    %v117 = vcosq.f32.pop %v115
    %v118 = vsinq.f32.pop %v115
    %vm119 = vweird.f32 %v26
    %v120 = vadd.s32 %v116, 3
    %v121 = vand.u32 %v120, 3
    %vm122 = vcmp.lt.s32.totalorder %v121, 2
    %vm123 = vcmp.eq.s32.totalorder %v121, 0
    %v124 = vxor.u32 %v118, 2147483648
    %v125 = vsel %vm123, %v117, %v124
    %vm126 = vcmp.eq.s32.totalorder %v121, 2
    %v127 = vxor.u32 %v117, 2147483648
    %v128 = vsel %vm126, %v127, %v118
    %v129 = vsel %vm122, %v125, %v128
    %v130 = vsel %vm119, nan, %v129
    %131 = vst [vmem:[#allocation2] sm:$0xff] %v130
    %v132 = vand.u32 2147483647, %v26
    %vm133 = vcmp.le.f32.partialorder %v132, 0.7853982
    %vm134 = vcmp.lt.s32.totalorder %v26, 0
    %v135 = vand.u32 %v26, 2139095040
    %v136 = vshrl.u32 %v135, 23
    %v137 = vsub.s32 %v136, 127
    %v138 = vand.u32 2147483647, %v26
    %v139 = vand.u32 %v138, 8388607
    %v140 = vor.u32 %v139, 8388608
    %v141 = vsub.s32 0, %v140
    %v142 = vadd.s32 %v137, 1
    %vm143 = vcmp.gt.s32.totalorder %v142, 0
    %v144 = vsel %vm143, %v142, 0
    %v145 = vshrl.u32 %v144, 5
    %v146 = vand.u32 %v144, 31
    %v147 = vsub.s32 32, %v146
    %v148 = vshrl.u32 683565275, %v147
    %v149 = vshll.u32 683565275, %v146
    %v150 = vshrl.u32 2475754826, %v147
    %v151 = vor.u32 %v149, %v150
    %v152 = vshll.u32 2475754826, %v146
    %v153 = vshrl.u32 2131351028, %v147
    %v154 = vor.u32 %v152, %v153
    %v155 = vshll.u32 2131351028, %v146
    %v156 = vshrl.u32 2102212464, %v147
    %v157 = vor.u32 %v155, %v156
    %v158 = vshll.u32 2102212464, %v146
    %v159 = vshrl.u32 920167782, %v147
    %v160 = vor.u32 %v158, %v159
    %v161 = vshll.u32 920167782, %v146
    %v162 = vshrl.u32 1326507024, %v147
    %v163 = vor.u32 %v161, %v162
    %vm164 = vcmp.lt.s32.totalorder %v145, 1
    %vm165 = vcmp.lt.s32.totalorder %v145, 2
    %vm166 = vcmp.lt.s32.totalorder %v145, 3
    %vm167 = vcmp.lt.s32.totalorder %v145, 4
    %v168 = vsel %vm164, %v148, %v151
    %v169 = vsel %vm167, %v157, 2102212464
    %v170 = vsel %vm166, %v154, %v169
    %v171 = vsel %vm165, %v168, %v170
    %v172 = vsel %vm164, %v151, %v154
    %v173 = vsel %vm167, %v160, 920167782
    %v174 = vsel %vm166, %v157, %v173
    %v175 = vsel %vm165, %v172, %v174
    %v176 = vsel %vm164, %v154, %v157
    %v177 = vsel %vm167, %v163, 1326507024
    %v178 = vsel %vm166, %v160, %v177
    %v179 = vsel %vm165, %v176, %v178
    %v180 = vshll.u32 %v140, 8
    %v181 = vmul.u32.u64.compose %v180, %v179
    %v182 = vextract.low.u32 %v181
    %v183 = vextract.high.u32 %v181
    %v184 = vmul.u32.u64.compose %v180, %v175
    %v185 = vextract.low.u32 %v184
    %v186 = vextract.high.u32 %v184
    %v187 = vmul.u32 %v180, %v171
    %v188 = vadd.s32 %v183, %v185
    %vm189 = vc.u32 %v183, %v185
    %v190 = vadd.s32 %v186, 1
    %v191 = vsel %vm189, %v190, %v186
    %v192 = vadd.s32 %v187, %v191
    %v193 = vadd.s32 %v192, 536870912
    %v194 = vshrl.u32 %v193, 30
    %v195 = vshll.u32 %v194, 30
    %v196 = vsub.s32 %v192, %v195
    %vm197 = vcmp.lt.s32.totalorder %v196, 0
    %v198 = vsub.s32 0, %v196
    %v199 = vsel %vm197, %v198, %v196
    %v200 = vclz %v199
    %v201 = vsub.s32 %v200, 2
    %vm202 = vcmp.gt.s32.totalorder 0, %v201
    %v203 = vsel %vm202, 0, %v201
    %v204 = vsub.s32 32, %v203
    %v205 = vshll.u32 %v196, %v203
    %v206 = vshrl.u32 %v188, %v204
    %v207 = vor.u32 %v205, %v206
    %v208 = vsub.s32 4294967266, %v203
    %v209 = vadd.s32 %v208, 127
    %v210 = vshll.u32 %v209, 23
    %v211 = vor.u32 4788187, %v210
    %v212 = vand.u32 2147483647, %v211
    %v214 = vcvt.s32.f32 %v207
    %v215 = vmul.f32 %v214, %v212
    %v216 = vxor.u32 %v215, 2147483648
    %v217 = vsel %vm134, %v216, %v215
    %v218 = vsub.s32 4, %v194
    %v219 = vsel %vm134, %v218, %v194
    %v220 = vsel %vm133, %v26, %v217
    %v221 = vsel %vm133, 0, %v219
    %v222 = vcosq.f32.pop %v220
    %v223 = vsinq.f32.pop %v220
    %vm224 = vweird.f32 %v26
    %v225 = vand.u32 %v221, 3
    %vm226 = vcmp.lt.s32.totalorder %v225, 2
    %vm227 = vcmp.eq.s32.totalorder %v225, 0
    %v228 = vxor.u32 %v223, 2147483648
    %v229 = vsel %vm227, %v222, %v228
    %vm230 = vcmp.eq.s32.totalorder %v225, 2
    %v231 = vxor.u32 %v222, 2147483648
    %v232 = vsel %vm230, %v231, %v223
    %v233 = vsel %vm226, %v229, %v232
    %v234 = vsel %vm224, nan, %v233
    %235 = vst [vmem:[#allocation2 + $0x8] sm:$0xff] %v234
    // Predicated region
    $region10: #{tpu_custom_call.1} parent=1 // pred_check
      _
    $region11: #{tpu_custom_call.1} parent=1 // pred_check_branch
      %237 = sbr.rel (0) target = $region13
    $region12: #{tpu_custom_call.1} parent=1 // pred_region
      %s239 = ssub.s32 256, 256
      %240 = vsyncadd [#allocation3], %s239
      %s241 = sshll.u32 [#allocation2], 4
      %s242 = int_to_ptr.vmem [resolvable:$true] %s241
      %247 = dma.vmem_to_hbm [thread:$0]  %s242, 256, %s2, [#allocation3], 128, 128, 8
    $region13: #{tpu_custom_call.1} parent=1 // pred_fallthru
      _
    // Predicated region
    $region14: #{tpu_custom_call.1} parent=1 // pred_check
      _
    $region15: #{tpu_custom_call.1} parent=1 // pred_check_branch
      %249 = sbr.rel (0) target = $region17
    $region16: #{tpu_custom_call.1} parent=1 // pred_region
      %250 = dma.done [#allocation3], 256
    $region17: #{tpu_custom_call.1} parent=1 // pred_fallthru
      _
    %251 = vsyncpa [#allocation3], 1

</llo_original>
